<compile_context>
chip_gen: v6e
topology: v6e:2x2x1
jax: 0.10.0
libtpu: 0.0.40
codegen_flags: <defaults>
</compile_context>

<pallas_src>
from functools import partial

import jax
import jax.numpy as jnp
from jax.experimental import pallas as pl
from jax.experimental.pallas import tpu as pltpu


def concat_embed_kernel(embed_ref, w_ref, b_ref, gamma_ref, beta_ref,
                        rep_mat_ref, inp_hbm, out_hbm,
                        rep_vmem, dma_sems, *, C, P, HW, eps, neg_slope):
    c_cols = C * HW          # width of the pass-through slab
    p_cols = P * HW          # width of the replicated-embed slab

    # ---- (1) pass-through: inp -> out[:, :C*HW] as an HBM->HBM DMA ----------
    # Started first so it overlaps with all the compute below.
    inp_cp = pltpu.make_async_copy(inp_hbm, out_hbm.at[:, 0:c_cols],
                                   dma_sems.at[0])
    inp_cp.start()

    # ---- (2) Linear(E -> P) on the MXU ---------------------------------------
    z = jnp.dot(embed_ref[...], w_ref[...],
                preferred_element_type=jnp.float32) + b_ref[...]        # (B, P)

    # ---- (3) BatchNorm1d, training mode (batch stats, biased variance) -------
    mean = jnp.mean(z, axis=0, keepdims=True)                           # (1, P)
    var = jnp.mean((z - mean) ** 2, axis=0, keepdims=True)              # (1, P)
    scale = gamma_ref[...] * jax.lax.rsqrt(var + eps)                   # gamma folded in
    y = (z - mean) * scale + beta_ref[...]

    # ---- (4) LeakyReLU(negative_slope) ----------------------------------------
    y = jnp.where(y >= 0.0, y, neg_slope * y)                           # (B, P)

    # ---- (5) replicate over the 4x4 spatial positions, lane-dense -------------
    # rep_mat[p, p*HW + s] = 1  =>  (y @ rep_mat)[b, p*HW + s] = y[b, p]
    # Result is produced with P*HW on the lane axis: full-width stores, no
    # XLU relayout of y from lanes to sublanes.
    rep_vmem[...] = jnp.dot(y, rep_mat_ref[...],
                            preferred_element_type=jnp.float32
                            ).astype(rep_vmem.dtype)                    # (B, P*HW)

    # ---- (6) replicated embed -> out[:, C*HW:] via DMA -------------------------
    rep_cp = pltpu.make_async_copy(rep_vmem,
                                   out_hbm.at[:, c_cols:c_cols + p_cols],
                                   dma_sems.at[1])
    rep_cp.start()

    inp_cp.wait()
    rep_cp.wait()


def concat_embed(inp, embed, w, b, gamma, beta, *, eps=1e-5, neg_slope=0.2):
    """inp: (B, C, 4, 4) NCHW; embed: (B, E); w: (E, P) (= Linear.weight.T).

    Returns (B, C+P, 4, 4) = cat([inp, LeakyReLU(BN(embed @ w + b)) tiled 4x4], dim=1).
    """
    B, C, H, W = inp.shape
    E, P = w.shape
    HW = H * W

    inp_flat = inp.reshape(B, C * HW)             # layout-preserving (free)

    # Constant 0/1 replication matrix (P, P*HW): rep_mat[p, p*HW + s] = 1.
    lane_chan = jnp.arange(P * HW, dtype=jnp.int32) // HW
    rep_mat = (jnp.arange(P, dtype=jnp.int32)[:, None] == lane_chan[None, :]
               ).astype(jnp.float32)

    out_flat = pl.pallas_call(
        partial(concat_embed_kernel, C=C, P=P, HW=HW,
                eps=eps, neg_slope=neg_slope),
        out_shape=jax.ShapeDtypeStruct((B, (C + P) * HW), inp.dtype),
        in_specs=[pl.BlockSpec(memory_space=pltpu.MemorySpace.VMEM)] * 6
                 + [pl.BlockSpec(memory_space=pl.ANY)],       # inp stays in HBM
        out_specs=pl.BlockSpec(memory_space=pl.ANY),          # out written via DMA
        scratch_shapes=[pltpu.VMEM((B, P * HW), inp.dtype),   # lane-dense embed slab
                        pltpu.SemaphoreType.DMA((2,))],
    )(embed, w, b.reshape(1, P), gamma.reshape(1, P), beta.reshape(1, P),
      rep_mat, inp_flat)

    return out_flat.reshape(B, C + P, H, W)       # free reshape back to NCHW


def concat_embed_ref(inp, embed, w, b, gamma, beta, *, eps=1e-5, neg_slope=0.2):
    """Pure-JAX reference of the PyTorch forward (training-mode BatchNorm1d)."""
    B, C, H, W = inp.shape
    z = embed @ w + b
    mean = z.mean(axis=0, keepdims=True)
    var = ((z - mean) ** 2).mean(axis=0, keepdims=True)
    y = (z - mean) * jax.lax.rsqrt(var + eps) * gamma + beta
    y = jnp.where(y >= 0, y, neg_slope * y)
    rep = jnp.broadcast_to(y[:, :, None, None], (B, y.shape[1], H, W))
    return jnp.concatenate([inp, rep.astype(inp.dtype)], axis=1)


if __name__ == "__main__":
    # Small shapes consistent with the forward pass:
    #   inp spatial MUST be 4x4 (repeat(4,4,1,1) in the reference module).
    B, C, H, W = 2, 8, 4, 4          # inp: (B, C, 4, 4)
    E, P = 32, 16                    # embed_dim, projected_embed_dim

    key = jax.random.PRNGKey(0)
    k_inp, k_emb, k_w, k_b = jax.random.split(key, 4)

    inp = jax.random.normal(k_inp, (B, C, H, W), dtype=jnp.float32)
    embed = jax.random.normal(k_emb, (B, E), dtype=jnp.float32)

    # Deterministic parameter init (Linear weight stored as (E, P) = W^T).
    w = jax.random.normal(k_w, (E, P), dtype=jnp.float32) * 0.05
    b = jax.random.normal(k_b, (P,), dtype=jnp.float32) * 0.05
    gamma = jnp.ones((P,), dtype=jnp.float32)   # BatchNorm1d default weight
    beta = jnp.zeros((P,), dtype=jnp.float32)   # BatchNorm1d default bias

    out = concat_embed(inp, embed, w, b, gamma, beta)
    out = jax.block_until_ready(out)
    assert out.shape == (B, C + P, H, W), out.shape

    ref = concat_embed_ref(inp, embed, w, b, gamma, beta)
    max_err = float(jnp.max(jnp.abs(out - ref)))
    assert jnp.allclose(out, ref, rtol=1e-2, atol=1e-2), max_err

    print("KERNEL_OK")
</pallas_src>

<mosaic_0001>
module attributes {stable_mosaic.version = 11 : i64} {
  func.func @concat_embed_kernel(%arg0: memref<2x32xf32, #tpu.memory_space<vmem>>, %arg1: memref<32x16xf32, #tpu.memory_space<vmem>>, %arg2: memref<1x16xf32, #tpu.memory_space<vmem>>, %arg3: memref<1x16xf32, #tpu.memory_space<vmem>>, %arg4: memref<1x16xf32, #tpu.memory_space<vmem>>, %arg5: memref<16x256xf32, #tpu.memory_space<vmem>>, %arg6: memref<2x128xf32, #tpu.memory_space<any>>, %arg7: memref<2x384xf32, #tpu.memory_space<any>>, %arg8: memref<2x256xf32, #tpu.memory_space<vmem>>, %arg9: memref<2x!tpu.dma_semaphore, #tpu.memory_space<semaphore_mem>>) attributes {dimension_semantics = [], scalar_prefetch = 0 : i64, scratch_operands = 2 : i64, tpu.core_type = #tpu.core_type<tc>} {
    %c0_i32 = arith.constant 0 : i32
    %c0_i32_0 = arith.constant 0 : i32
    %c0_i32_1 = arith.constant 0 : i32
    %0 = tpu.memref_slice %arg7[%c0_i32_0, %c0_i32_1] : memref<2x384xf32, #tpu.memory_space<any>> -> memref<2x128xf32, #tpu.memory_space<any>>
    %1 = tpu.memref_slice %arg9[%c0_i32] : memref<2x!tpu.dma_semaphore, #tpu.memory_space<semaphore_mem>> -> memref<1x!tpu.dma_semaphore, #tpu.memory_space<semaphore_mem>>
    %2 = tpu.memref_squeeze %1 : memref<1x!tpu.dma_semaphore, #tpu.memory_space<semaphore_mem>> -> memref<!tpu.dma_semaphore, #tpu.memory_space<semaphore_mem>>
    tpu.enqueue_dma source(%arg6 : memref<2x128xf32, #tpu.memory_space<any>>) target(%0 : memref<2x128xf32, #tpu.memory_space<any>>) target_semaphore(%2 : memref<!tpu.dma_semaphore, #tpu.memory_space<semaphore_mem>>)
    %c0 = arith.constant 0 : index
    %c0_2 = arith.constant 0 : index
    %3 = vector.load %arg0[%c0, %c0_2] : memref<2x32xf32, #tpu.memory_space<vmem>>, vector<2x32xf32>
    %c0_3 = arith.constant 0 : index
    %c0_4 = arith.constant 0 : index
    %4 = vector.load %arg1[%c0_3, %c0_4] : memref<32x16xf32, #tpu.memory_space<vmem>>, vector<32x16xf32>
    %cst = arith.constant dense<0.000000e+00> : vector<2x16xf32>
    %5 = tpu.matmul %3, %4, %cst {dimension_numbers = #tpu.dot_dimension_numbers<[1], [0], [0], [1], [0, 0, 1, 1], [], []>} : vector<2x32xf32>, vector<32x16xf32>, vector<2x16xf32> -> vector<2x16xf32>
    %c0_5 = arith.constant 0 : index
    %c0_6 = arith.constant 0 : index
    %6 = vector.load %arg2[%c0_5, %c0_6] : memref<1x16xf32, #tpu.memory_space<vmem>>, vector<1x16xf32>
    %7 = vector.broadcast %6 : vector<1x16xf32> to vector<2x16xf32>
    %8 = arith.addf %5, %7 : vector<2x16xf32>
    %cst_7 = arith.constant dense<0.000000e+00> : vector<16xf32>
    %9 = vector.multi_reduction <add>, %8, %cst_7 [0] : vector<2x16xf32> to vector<16xf32>
    %10 = vector.shape_cast %9 : vector<16xf32> to vector<1x16xf32>
    %cst_8 = arith.constant 2.000000e+00 : f32
    %11 = vector.broadcast %cst_8 : f32 to vector<1x16xf32>
    %12 = arith.divf %10, %11 : vector<1x16xf32>
    %13 = vector.broadcast %12 : vector<1x16xf32> to vector<2x16xf32>
    %14 = arith.subf %8, %13 : vector<2x16xf32>
    %15 = arith.mulf %14, %14 : vector<2x16xf32>
    %cst_9 = arith.constant dense<0.000000e+00> : vector<16xf32>
    %16 = vector.multi_reduction <add>, %15, %cst_9 [0] : vector<2x16xf32> to vector<16xf32>
    %17 = vector.shape_cast %16 : vector<16xf32> to vector<1x16xf32>
    %cst_10 = arith.constant 2.000000e+00 : f32
    %18 = vector.broadcast %cst_10 : f32 to vector<1x16xf32>
    %19 = arith.divf %17, %18 : vector<1x16xf32>
    %c0_11 = arith.constant 0 : index
    %c0_12 = arith.constant 0 : index
    %20 = vector.load %arg3[%c0_11, %c0_12] : memref<1x16xf32, #tpu.memory_space<vmem>>, vector<1x16xf32>
    %cst_13 = arith.constant 9.99999974E-6 : f32
    %21 = vector.broadcast %cst_13 : f32 to vector<1x16xf32>
    %22 = arith.addf %19, %21 : vector<1x16xf32>
    %23 = math.rsqrt %22 : vector<1x16xf32>
    %24 = arith.mulf %20, %23 : vector<1x16xf32>
    %25 = vector.broadcast %12 : vector<1x16xf32> to vector<2x16xf32>
    %26 = arith.subf %8, %25 : vector<2x16xf32>
    %27 = vector.broadcast %24 : vector<1x16xf32> to vector<2x16xf32>
    %28 = arith.mulf %26, %27 : vector<2x16xf32>
    %c0_14 = arith.constant 0 : index
    %c0_15 = arith.constant 0 : index
    %29 = vector.load %arg4[%c0_14, %c0_15] : memref<1x16xf32, #tpu.memory_space<vmem>>, vector<1x16xf32>
    %30 = vector.broadcast %29 : vector<1x16xf32> to vector<2x16xf32>
    %31 = arith.addf %28, %30 : vector<2x16xf32>
    %cst_16 = arith.constant 0.000000e+00 : f32
    %32 = vector.broadcast %cst_16 : f32 to vector<2x16xf32>
    %33 = arith.cmpf oge, %31, %32 : vector<2x16xf32>
    %cst_17 = arith.constant 2.000000e-01 : f32
    %34 = vector.broadcast %cst_17 : f32 to vector<2x16xf32>
    %35 = arith.mulf %34, %31 : vector<2x16xf32>
    %36 = arith.select %33, %31, %35 : vector<2x16xi1>, vector<2x16xf32>
    %c0_18 = arith.constant 0 : index
    %c0_19 = arith.constant 0 : index
    %37 = vector.load %arg5[%c0_18, %c0_19] : memref<16x256xf32, #tpu.memory_space<vmem>>, vector<16x256xf32>
    %cst_20 = arith.constant dense<0.000000e+00> : vector<2x256xf32>
    %38 = tpu.matmul %36, %37, %cst_20 {dimension_numbers = #tpu.dot_dimension_numbers<[1], [0], [0], [1], [0, 0, 1, 1], [], []>} : vector<2x16xf32>, vector<16x256xf32>, vector<2x256xf32> -> vector<2x256xf32>
    %c0_21 = arith.constant 0 : index
    %c0_22 = arith.constant 0 : index
    %39 = vector.load %arg8[%c0_21, %c0_22] : memref<2x256xf32, #tpu.memory_space<vmem>>, vector<2x256xf32>
    tpu.vector_store %arg8[%c0_21, %c0_22], %38 {strides = array<i32>} : memref<2x256xf32, #tpu.memory_space<vmem>>, vector<2x256xf32>,
    %c1_i32 = arith.constant 1 : i32
    %c0_i32_23 = arith.constant 0 : i32
    %c128_i32 = arith.constant 128 : i32
    %40 = tpu.memref_slice %arg7[%c0_i32_23, %c128_i32] : memref<2x384xf32, #tpu.memory_space<any>> -> memref<2x256xf32, #tpu.memory_space<any>>
    %41 = tpu.memref_slice %arg9[%c1_i32] : memref<2x!tpu.dma_semaphore, #tpu.memory_space<semaphore_mem>> -> memref<1x!tpu.dma_semaphore, #tpu.memory_space<semaphore_mem>>
    %42 = tpu.memref_squeeze %41 : memref<1x!tpu.dma_semaphore, #tpu.memory_space<semaphore_mem>> -> memref<!tpu.dma_semaphore, #tpu.memory_space<semaphore_mem>>
    tpu.enqueue_dma source(%arg8 : memref<2x256xf32, #tpu.memory_space<vmem>>) target(%40 : memref<2x256xf32, #tpu.memory_space<any>>) target_semaphore(%42 : memref<!tpu.dma_semaphore, #tpu.memory_space<semaphore_mem>>)
    %c0_i32_24 = arith.constant 0 : i32
    %c0_i32_25 = arith.constant 0 : i32
    %c0_i32_26 = arith.constant 0 : i32
    %43 = tpu.memref_slice %arg7[%c0_i32_25, %c0_i32_26] : memref<2x384xf32, #tpu.memory_space<any>> -> memref<2x128xf32, #tpu.memory_space<any>>
    %44 = tpu.memref_slice %arg9[%c0_i32_24] : memref<2x!tpu.dma_semaphore, #tpu.memory_space<semaphore_mem>> -> memref<1x!tpu.dma_semaphore, #tpu.memory_space<semaphore_mem>>
    %45 = tpu.memref_squeeze %44 : memref<1x!tpu.dma_semaphore, #tpu.memory_space<semaphore_mem>> -> memref<!tpu.dma_semaphore, #tpu.memory_space<semaphore_mem>>
    tpu.wait_dma2 semaphore(%45 : memref<!tpu.dma_semaphore, #tpu.memory_space<semaphore_mem>>) src(%arg6 : memref<2x128xf32, #tpu.memory_space<any>>) dst(%43 : memref<2x128xf32, #tpu.memory_space<any>>)
    %c1_i32_27 = arith.constant 1 : i32
    %c0_i32_28 = arith.constant 0 : i32
    %c128_i32_29 = arith.constant 128 : i32
    %46 = tpu.memref_slice %arg7[%c0_i32_28, %c128_i32_29] : memref<2x384xf32, #tpu.memory_space<any>> -> memref<2x256xf32, #tpu.memory_space<any>>
    %47 = tpu.memref_slice %arg9[%c1_i32_27] : memref<2x!tpu.dma_semaphore, #tpu.memory_space<semaphore_mem>> -> memref<1x!tpu.dma_semaphore, #tpu.memory_space<semaphore_mem>>
    %48 = tpu.memref_squeeze %47 : memref<1x!tpu.dma_semaphore, #tpu.memory_space<semaphore_mem>> -> memref<!tpu.dma_semaphore, #tpu.memory_space<semaphore_mem>>
    tpu.wait_dma2 semaphore(%48 : memref<!tpu.dma_semaphore, #tpu.memory_space<semaphore_mem>>) src(%arg8 : memref<2x256xf32, #tpu.memory_space<vmem>>) dst(%46 : memref<2x256xf32, #tpu.memory_space<any>>)
    return
  }
}

</mosaic_0001>

<llo_original>
// kernel: tpu_custom_call.1
$region0: #{tpu_custom_call.1}
  #allocation0 [shape = 'u32[]', space=smem, size = 0x4, offset = 0x4, fixed_abs, tag = 'smem constant byte address 0x4 - core index']
  #allocation1 [shape = 'u32[144,128]{1,0:T(1,128)}', space=vmem, size = 0x12000, scoped, tag = 'internal scratch']
  #allocation2 [shape = 'f32[2,256]{1,0:T(2,128)}', space=vmem, size = 0x800, scoped, tag = 'scratch operand']
  #allocation3 [shape = 's32[2]{0}', space=sflag, size = 0x8, scoped, tag = 'scratch operand']
  #allocation4 [shape = 's32[]', space=sflag, size = 0x4, offset = 0, fixed_abs, tag = 'sflag constant byte address 0x0 - dummy sync flag']
  #allocation5 [shape = 's32[]', space=sflag, size = 0x4, offset = 0, fixed_abs, tag = 'sflag constant byte address 0x0 - dummy sync flag']
  #allocation6 [shape = 'u32[]', space=smem, size = 0x4, offset = 0x44, fixed_abs, tag = 'smem constant byte address 0x44 - assertion arg 0']
  #allocation7 [shape = 'u32[]', space=smem, size = 0x4, offset = 0x48, fixed_abs, tag = 'smem constant byte address 0x48 - assertion arg 1']
  #allocation8 [shape = 's32[]', space=sflag, size = 0x4, offset = 0, fixed_abs, tag = 'sflag constant byte address 0x0 - dummy sync flag']
  #allocation9 [shape = 's32[]', space=sflag, size = 0x4, offset = 0, fixed_abs, tag = 'sflag constant byte address 0x0 - dummy sync flag']
  %s0 = inlined_call_operand.vmem [shape: f32[2,32], index: 0, kind: input, shape index: {}]
  %s1 = inlined_call_operand.vmem [shape: f32[32,16], index: 1, kind: input, shape index: {}]
  %s2 = inlined_call_operand.vmem [shape: f32[1,16], index: 2, kind: input, shape index: {}]
  %s3 = inlined_call_operand.vmem [shape: f32[1,16], index: 3, kind: input, shape index: {}]
  %s4 = inlined_call_operand.vmem [shape: f32[1,16], index: 4, kind: input, shape index: {}]
  %s5 = inlined_call_operand.vmem [shape: f32[16,256], index: 5, kind: input, shape index: {}]
  %s6 = inlined_call_operand.vmem [shape: f32[2,128], index: 6, kind: input, shape index: {}]
  %s7 = inlined_call_operand.hbm [shape: f32[2,384], index: 7, kind: output, shape index: {}]
  %s8 = sld [smem:[#allocation0]]
  $region34: #{tpu_custom_call.1} parent=0
    _
  %s10 = ssub.s32 1, %s8
  %s11 = scalar_select 0, %s10, %s8
  // Predicated region
  $region2: #{tpu_custom_call.1} parent=0 // pred_check
    _
  $region3: #{tpu_custom_call.1} parent=0 // pred_check_branch
    %13 = sbr.rel (0) target = $region5
  $region4: #{tpu_custom_call.1} parent=0 // pred_region
    _
  $region5: #{tpu_custom_call.1} parent=0 // pred_fallthru
    _
  // Predicated region
  $region6: #{tpu_custom_call.1} parent=0 // pred_check
    _
  $region7: #{tpu_custom_call.1} parent=0 // pred_check_branch
    %15 = sbr.rel (0) target = $region9
  $region8: #{tpu_custom_call.1} parent=0 // pred_region
    _
  $region9: #{tpu_custom_call.1} parent=0 // pred_fallthru
    _
  // Predicated region
  $region10: #{tpu_custom_call.1} parent=0 // pred_check
    _
  $region11: #{tpu_custom_call.1} parent=0 // pred_check_branch
    %17 = sbr.rel (0) target = $region13
  $region12: #{tpu_custom_call.1} parent=0 // pred_region
    _
  $region13: #{tpu_custom_call.1} parent=0 // pred_fallthru
    _
  // Predicated region
  $region14: #{tpu_custom_call.1} parent=0 // pred_check
    _
  $region15: #{tpu_custom_call.1} parent=0 // pred_check_branch
    %19 = sbr.rel (0) target = $region17
  $region16: #{tpu_custom_call.1} parent=0 // pred_region
    _
  $region17: #{tpu_custom_call.1} parent=0 // pred_fallthru
    _
  // Predicated region
  $region18: #{tpu_custom_call.1} parent=0 // pred_check
    _
  $region19: #{tpu_custom_call.1} parent=0 // pred_check_branch
    %21 = sbr.rel (0) target = $region21
  $region20: #{tpu_custom_call.1} parent=0 // pred_region
    _
  $region21: #{tpu_custom_call.1} parent=0 // pred_fallthru
    _
  // Predicated region
  $region22: #{tpu_custom_call.1} parent=0 // pred_check
    _
  $region23: #{tpu_custom_call.1} parent=0 // pred_check_branch
    %23 = sbr.rel (0) target = $region25
  $region24: #{tpu_custom_call.1} parent=0 // pred_region
    _
  $region25: #{tpu_custom_call.1} parent=0 // pred_fallthru
    _
  // Predicated region
  $region26: #{tpu_custom_call.1} parent=0 // pred_check
    _
  $region27: #{tpu_custom_call.1} parent=0 // pred_check_branch
    %25 = sbr.rel target = $region29
  $region28: #{tpu_custom_call.1} parent=0 // pred_region
    %26 = sst [smem:[#allocation6]] [#allocation5]
    %27 = sst [smem:[#allocation7]] [#allocation4]
  $region29: #{tpu_custom_call.1} parent=0 // pred_fallthru
    _
  %29 = shalt.err (0)
  %s31 = sshll.u32 %s6, 4
  %s32 = int_to_ptr.vmem [resolvable:$true] %s31
  %34 = dma.vmem_to_hbm [thread:$0]  %s32, 32, %s7, [#allocation3]
  %v35 = vld [vmem:[%s0] sm:$0x3]
  %v36 = vld [vmem:[%s1] sm:$0xff]
  %v37 = vld [vmem:[%s1 + $0x8] sm:$0xff]
  %v38 = vld [vmem:[%s1 + $0x10] sm:$0xff]
  %v39 = vld [vmem:[%s1 + $0x18] sm:$0xff]
  %v40 = vld [vmem:[%s2] sm:$0x1]
  %v42 = vlaneseq
  %v43 = vshrl.u32 %v42, 7
  %v44 = vsub.s32 0, %v43
  %v45 = vrot.slane %v40, %v44
  %vm47 = vcmask 261120
  %v49 = vsel %vm47, %v35, 0
  %51 = vmatprep.subr.mxu0 0.0
  %52 = vmatpush1.msra.mxu0 0.0
  %53 = vmatprep.subr.mxu0 0.0
  %54 = vmatpush1.msra.mxu0 0.0
  %55 = vmatprep.subr.mxu0 0.0
  %56 = vmatpush1.msra.mxu0 0.0
  %57 = vmatprep.subr.mxu0 0.0
  %58 = vmatpush1.msra.mxu0 0.0
  %59 = vmatprep.subr.mxu0 0.0
  %60 = vmatpush1.msra.mxu0 0.0
  %61 = vmatprep.subr.mxu0 0.0
  %62 = vmatpush1.msra.mxu0 0.0
  %63 = vmatprep.subr.mxu0 0.0
  %64 = vmatpush1.msra.mxu0 0.0
  %65 = vmatprep.subr.mxu0 0.0
  %66 = vmatpush1.msra.mxu0 0.0
  %67 = vmatprep.subr.mxu0 0.0
  %68 = vmatpush1.msra.mxu0 0.0
  %69 = vmatprep.subr.mxu0 0.0
  %70 = vmatpush1.msra.mxu0 0.0
  %71 = vmatprep.subr.mxu0 0.0
  %72 = vmatpush1.msra.mxu0 0.0
  %73 = vmatprep.subr.mxu0 0.0
  %74 = vmatpush1.msra.mxu0 0.0
  %75 = vmatprep.subr.mxu0 0.0
  %76 = vmatpush1.msra.mxu0 %v39
  %77 = vmatprep.subr.mxu0 0.0
  %78 = vmatpush1.msra.mxu0 %v38
  %79 = vmatprep.subr.mxu0 0.0
  %80 = vmatpush1.msra.mxu0 %v37
  %81 = vmatprep.subr.mxu0 0.0
  %82 = vmatpush1.msra.mxu0 %v36
  %83 = vmatprep.subr.mxu0 0.0
  %84 = vmatpush2.msra.mxu0 0.0
  %85 = vmatprep.subr.mxu0 0.0
  %86 = vmatpush2.msra.mxu0 0.0
  %87 = vmatprep.subr.mxu0 0.0
  %88 = vmatpush2.msra.mxu0 0.0
  %89 = vmatprep.subr.mxu0 0.0
  %90 = vmatpush2.msra.mxu0 0.0
  %91 = vmatprep.subr.mxu0 0.0
  %92 = vmatpush2.msra.mxu0 0.0
  %93 = vmatprep.subr.mxu0 0.0
  %94 = vmatpush2.msra.mxu0 0.0
  %95 = vmatprep.subr.mxu0 0.0
  %96 = vmatpush2.msra.mxu0 0.0
  %97 = vmatprep.subr.mxu0 0.0
  %98 = vmatpush2.msra.mxu0 0.0
  %99 = vmatprep.subr.mxu0 0.0
  %100 = vmatpush2.msra.mxu0 0.0
  %101 = vmatprep.subr.mxu0 0.0
  %102 = vmatpush2.msra.mxu0 0.0
  %103 = vmatprep.subr.mxu0 0.0
  %104 = vmatpush2.msra.mxu0 0.0
  %105 = vmatprep.subr.mxu0 0.0
  %106 = vmatpush2.msra.mxu0 0.0
  %107 = vmatprep.subr.mxu0 0.0
  %108 = vmatpush2.msra.mxu0 0.0
  %109 = vmatprep.subr.mxu0 0.0
  %110 = vmatpush2.msra.mxu0 0.0
  %111 = vmatprep.subr.mxu0 0.0
  %112 = vmatpush2.msra.mxu0 0.0
  %113 = vmatprep.subr.mxu0 0.0
  %114 = vmatpush2.msra.mxu0 0.0
  %115 = vmatprep.mubr.f32.mxu0 0.0
  %116 = vmatmul.mubr.f32.gmra.mxu0 %v49
  %v117 = vpop.f32.mrf.mxu0
  %v118 = vadd.f32 %v45, %v117
  %v119 = vpop.f32.mrf.mxu0
  %120 = vdwg.mxu0
  %vm121 = vcmask 123904
  %v122 = vsel %vm121, %v118, 0.0
  %v123 = vrot.slane %v122, 4
  %v124 = vadd.f32 %v122, %v123
  %v125 = vrot.slane %v124, 2
  %v126 = vadd.f32 %v124, %v125
  %v127 = vrot.slane %v126, 1
  %v128 = vadd.f32 %v126, %v127
  %v129 = vrcp.pop 2.0
  %v130 = vmul.f32 %v128, %v129
  %v131 = vsub.f32 %v118, %v130
  %v132 = vmul.f32 %v131, %v131
  %v133 = vsel %vm121, %v132, 0.0
  %v134 = vrot.slane %v133, 4
  %v135 = vadd.f32 %v133, %v134
  %v136 = vrot.slane %v135, 2
  %v137 = vadd.f32 %v135, %v136
  %v138 = vrot.slane %v137, 1
  %v139 = vadd.f32 %v137, %v138
  %v140 = vmul.f32 %v139, %v129
  %v141 = vld [vmem:[%s3] sm:$0x1]
  %v142 = vadd.f32 %v140, 1e-05
  %v143 = vrsqrt.pop %v142
  %v144 = vmul.f32 %v141, %v143
  %v146 = vlaneseq
  %v147 = vshrl.u32 %v146, 7
  %v148 = vsub.s32 0, %v147
  %v149 = vrot.slane %v144, %v148
  %v151 = vmul.f32 %v131, %v149
  %v152 = vld [vmem:[%s4] sm:$0x1]
  %v154 = vlaneseq
  %v155 = vshrl.u32 %v154, 7
  %v156 = vsub.s32 0, %v155
  %v157 = vrot.slane %v152, %v156
  %v159 = vadd.f32 %v151, %v157
  %vm160 = vcmp.ge.f32.partialorder %v159, 0.0
  %v161 = vmul.f32 %v159, 0.2
  %v162 = vsel %vm160, %v159, %v161
  %v163 = vld [vmem:[%s5] sm:$0xff]
  %v164 = vld [vmem:[%s5 + $0x8] sm:$0xff]
  %v165 = vld [vmem:[%s5 + $0x10] sm:$0xff]
  %v166 = vld [vmem:[%s5 + $0x18] sm:$0xff]
  %vm167 = vcmask 130048
  %v169 = vsel %vm167, %v162, 0
  %171 = vmatprep.subr.mxu0 0.0
  %172 = vmatpush1.msra.mxu0 0.0
  %173 = vmatprep.subr.mxu0 0.0
  %174 = vmatpush1.msra.mxu0 0.0
  %175 = vmatprep.subr.mxu0 0.0
  %176 = vmatpush1.msra.mxu0 0.0
  %177 = vmatprep.subr.mxu0 0.0
  %178 = vmatpush1.msra.mxu0 0.0
  %179 = vmatprep.subr.mxu0 0.0
  %180 = vmatpush1.msra.mxu0 0.0
  %181 = vmatprep.subr.mxu0 0.0
  %182 = vmatpush1.msra.mxu0 0.0
  %183 = vmatprep.subr.mxu0 0.0
  %184 = vmatpush1.msra.mxu0 0.0
  %185 = vmatprep.subr.mxu0 0.0
  %186 = vmatpush1.msra.mxu0 0.0
  %187 = vmatprep.subr.mxu0 0.0
  %188 = vmatpush1.msra.mxu0 0.0
  %189 = vmatprep.subr.mxu0 0.0
  %190 = vmatpush1.msra.mxu0 0.0
  %191 = vmatprep.subr.mxu0 0.0
  %192 = vmatpush1.msra.mxu0 0.0
  %193 = vmatprep.subr.mxu0 0.0
  %194 = vmatpush1.msra.mxu0 0.0
  %195 = vmatprep.subr.mxu0 0.0
  %196 = vmatpush1.msra.mxu0 0.0
  %197 = vmatprep.subr.mxu0 0.0
  %198 = vmatpush1.msra.mxu0 0.0
  %199 = vmatprep.subr.mxu0 %v166
  %200 = vmatpush1.msra.mxu0 %v165
  %201 = vmatprep.subr.mxu0 %v164
  %202 = vmatpush1.msra.mxu0 %v163
  %203 = vmatprep.subr.mxu0 0.0
  %204 = vmatpush2.msra.mxu0 0.0
  %205 = vmatprep.subr.mxu0 0.0
  %206 = vmatpush2.msra.mxu0 0.0
  %207 = vmatprep.subr.mxu0 0.0
  %208 = vmatpush2.msra.mxu0 0.0
  %209 = vmatprep.subr.mxu0 0.0
  %210 = vmatpush2.msra.mxu0 0.0
  %211 = vmatprep.subr.mxu0 0.0
  %212 = vmatpush2.msra.mxu0 0.0
  %213 = vmatprep.subr.mxu0 0.0
  %214 = vmatpush2.msra.mxu0 0.0
  %215 = vmatprep.subr.mxu0 0.0
  %216 = vmatpush2.msra.mxu0 0.0
  %217 = vmatprep.subr.mxu0 0.0
  %218 = vmatpush2.msra.mxu0 0.0
  %219 = vmatprep.subr.mxu0 0.0
  %220 = vmatpush2.msra.mxu0 0.0
  %221 = vmatprep.subr.mxu0 0.0
  %222 = vmatpush2.msra.mxu0 0.0
  %223 = vmatprep.subr.mxu0 0.0
  %224 = vmatpush2.msra.mxu0 0.0
  %225 = vmatprep.subr.mxu0 0.0
  %226 = vmatpush2.msra.mxu0 0.0
  %227 = vmatprep.subr.mxu0 0.0
  %228 = vmatpush2.msra.mxu0 0.0
  %229 = vmatprep.subr.mxu0 0.0
  %230 = vmatpush2.msra.mxu0 0.0
  %231 = vmatprep.subr.mxu0 0.0
  %232 = vmatpush2.msra.mxu0 0.0
  %233 = vmatprep.subr.mxu0 0.0
  %234 = vmatpush2.msra.mxu0 0.0
  %235 = vmatprep.mubr.f32.mxu0 0.0
  %236 = vmatmul.mubr.f32.gmra.mxu0 %v169
  %v237 = vpop.f32.mrf.mxu0
  %v238 = vadd.f32 0.0, %v237
  %v239 = vpop.f32.mrf.mxu0
  %v240 = vadd.f32 0.0, %v239
  %241 = vdwg.mxu0
  %v244 = vcombine.low %v238, %v240
  %v246 = vunpack.c.l.s4 1983009808
  %v247 = vunpack.c.0.s8 %v246
  %v248 = vlaneseq
  %v249 = vshrl.u32 %v248, 7
  %v250 = vsub.s32 %v247, %v249
  %v251 = vrot.slane %v244, %v250
  %253 = vst [vmem:[#allocation2] sm:$0xf] %v251
  %s254 = scalar_lea.hbm %s7, 32
  %s255 = scalar_lea.sflag [#allocation3], 1
  // Predicated region
  $region30: #{tpu_custom_call.1} parent=0 // pred_check
    _
  $region31: #{tpu_custom_call.1} parent=0 // pred_check_branch
    %257 = sbr.rel target = $region33
  $region32: #{tpu_custom_call.1} parent=0 // pred_region
    %258 = sst [smem:[#allocation6]] [#allocation9]
    %259 = sst [smem:[#allocation7]] [#allocation8]
  $region33: #{tpu_custom_call.1} parent=0 // pred_fallthru
    _
  %261 = shalt.err (0)
  %s263 = sshll.u32 [#allocation2], 4
  %s264 = int_to_ptr.vmem [resolvable:$true] %s263
  %266 = dma.vmem_to_hbm [thread:$0]  %s264, 64, %s254, %s255
  %s267 = smul.u32 2, 1
  %s268 = smul.u32 %s267, 1
  %s269 = sshll.u32 %s268, 4
  %270 = dma.done [#allocation3], %s269
  %s271 = smul.u32 %s267, 2
  %s272 = sshll.u32 %s271, 4
  %273 = dma.done %s255, %s272
  %274 = vsyncmov [#allocation3]
  %s275 = vpop.sfrf %274
  %p276 = scmp.eq.s32.totalorder %s275, 0
  %p277 = pneg %p276
  %279 = shalt.err (%p277)
  %s280 = scalar_lea.sflag [#allocation3], 1
  %281 = vsyncmov %s280
  %s282 = vpop.sfrf %281
  %p283 = scmp.eq.s32.totalorder %s282, 0
  %p284 = pneg %p283
  %286 = shalt.err (%p284)

</llo_original>
